<compile_context>
chip_gen: v7x
topology: tpu7x:2x2x1
jax: 0.10.0
libtpu: 0.0.40
codegen_flags: <defaults>
</compile_context>

<pallas_src>
import jax
import jax.numpy as jnp
from jax import lax
from jax.experimental import pallas as pl
from jax.experimental.pallas import tpu as pltpu

HIDDEN = 64
_LANE = 128


def mlp_kernel(x_ref, w1_ref, b1_ref, w2t_ref, b2_ref, o_ref):
    # x_ref:   (tb, D)   batch tile, streamed over the grid (f32 or bf16)
    # w1_ref:  (D, H)    resident
    # b1_ref:  (1, H)    resident, f32
    # w2t_ref: (1, H)    resident, f32 (W2 transposed -> row vector)
    # b2_ref:  (1,)      scalar in SMEM
    # o_ref:   (1, tb)   lane-dense output row for this batch tile
    h = jnp.dot(x_ref[...], w1_ref[...], preferred_element_type=jnp.float32)
    h = jnp.maximum(h + b1_ref[...], 0.0)                       # bias + ReLU
    # Second layer: contract h's hidden axis against W2^T so the result lands
    # directly as a lane-dense (1, tb) row rather than a (tb, 1) column.
    out = lax.dot_general(
        w2t_ref[...], h,
        dimension_numbers=(((1,), (1,)), ((), ())),
        preferred_element_type=jnp.float32,
    )                                                           # (1, tb)
    o_ref[...] = (out + b2_ref[0]).astype(o_ref.dtype)


def _num_tensorcores():
    """Best-effort TensorCore count addressable by a 'parallel' grid axis.
    v7x exposes 2 TCs per chip; v5e/v6e are single-TC.  Defaults to 1."""
    try:
        kind = jax.devices()[0].device_kind.lower()
    except Exception:
        return 1
    return 2 if "7" in kind else 1


def _pick_batch_tile(B, D, *, x_itemsize=4, num_cores=1):
    """Batch tile: multiple of 128 (lane-dense output), sized so each
    streamed x tile is ~4 MiB, capped by an explicit VMEM budget that
    accounts for double-buffered x, the double-buffered resident W1, and
    two h-sized f32 temporaries.  Splits into >=2 (even) tiles only when
    there are 2 TensorCores to feed (v7x)."""
    H = HIDDEN
    b_pad = -(-max(B, 1) // _LANE) * _LANE            # batch rounded up to 128

    # Per-batch-row VMEM cost inside the pipeline:
    #   2 x-tile buffers + ~2 h-sized f32 temporaries + 2 output-row buffers.
    per_row = 2 * D * x_itemsize + 2 * H * 4 + 2 * 4
    resident = 2 * D * H * x_itemsize + 4 * H * 4      # W1 dbuf + b1/w2t
    budget = 36 * 1024 * 1024                          # headroom under 48 MiB limit
    cap = max(_LANE, ((budget - resident) // per_row) // _LANE * _LANE)
    # TODO(synk): for very large D (W1 double-buffer tens of MiB), add a D
    # (reduction) grid axis with a VMEM accumulator instead of resident W1.

    # Byte target: ~4 MiB per streamed x tile, so per-step DMA dominates the
    # ~0.35 us per-grid-step overhead on all of v5e / v6e / v7x.
    target = max(_LANE, (4 * 1024 * 1024 // (D * x_itemsize)) // _LANE * _LANE)

    tb = min(target, cap, b_pad)

    if num_cores >= 2:
        # v7x: aim for an even number of 128-aligned tiles so both
        # TensorCores get equal work along the "parallel" batch axis.
        n = -(-b_pad // tb)
        if n == 1 and b_pad > _LANE:
            n = 2
        elif n > 1 and n % 2 == 1:
            n += 1
        per_tile = -(-b_pad // n)
        tb = min(tb, -(-per_tile // _LANE) * _LANE)

    return tb


def neural_net_forward(x, w1, b1, w2, b2, *, tb=None, stream_bf16=False):
    """Pallas implementation of NeuralNet.forward.

    x:  (B, D) float32
    w1: (D, 64), b1: (64,), w2: (64, 1), b2: (1,)   (x @ W layout)
    stream_bf16: opt-in bf16 streaming of x/W1 (f32 accumulation kept);
                 ~2x less HBM traffic, changes input rounding only.
    returns: (B,) float32  -- matches .squeeze(1) of the PyTorch module.
    """
    B, D = x.shape
    H = w1.shape[1]
    x_dtype = jnp.bfloat16 if stream_bf16 else jnp.float32

    if tb is None:
        tb = _pick_batch_tile(
            B, D,
            x_itemsize=jnp.dtype(x_dtype).itemsize,
            num_cores=_num_tensorcores(),
        )
    assert tb > 0 and tb % _LANE == 0, "batch tile must be a multiple of 128"

    # Pad ragged batches up to a multiple of the tile; sliced off at the end.
    n_tiles = -(-B // tb)
    Bp = n_tiles * tb
    if Bp != B:
        x = jnp.pad(x, ((0, Bp - B), (0, 0)))

    x = x.astype(x_dtype)
    w1c = w1.astype(x_dtype)
    b1_2d = b1.reshape(1, H).astype(jnp.float32)
    w2t = w2.reshape(H, 1).T.astype(jnp.float32)      # (1, H)
    b2_s = b2.reshape(1).astype(jnp.float32)          # scalar -> SMEM

    out = pl.pallas_call(
        mlp_kernel,
        out_shape=jax.ShapeDtypeStruct((1, Bp), jnp.float32),
        grid_spec=pltpu.PrefetchScalarGridSpec(
            num_scalar_prefetch=0,
            grid=(n_tiles,),
            in_specs=[
                pl.BlockSpec((tb, D), lambda i: (i, 0)),     # x: streamed over batch
                pl.BlockSpec((D, H), lambda i: (0, 0)),      # W1: resident
                pl.BlockSpec((1, H), lambda i: (0, 0)),      # b1: resident
                pl.BlockSpec((1, H), lambda i: (0, 0)),      # W2^T: resident
                pl.BlockSpec(memory_space=pltpu.MemorySpace.SMEM),  # b2 scalar
            ],
            out_specs=pl.BlockSpec((1, tb), lambda i: (0, i)),  # lane-dense row
        ),
        compiler_params=pltpu.CompilerParams(
            dimension_semantics=("parallel",),        # shard batch tiles on v7x
            vmem_limit_bytes=48 * 1024 * 1024,        # safe under v7x's 64 MiB
        ),
    )(x, w1c, b1_2d, w2t, b2_s)

    # (1, Bp) -> (B,); equivalent to .squeeze(1) after dropping padding.
    return out[0, :B]


def init_params(key, input_dim, hidden=HIDDEN):
    """Deterministic init mimicking PyTorch's default nn.Linear init
    (uniform(-1/sqrt(fan_in), 1/sqrt(fan_in)))."""
    k1, k2, k3, k4 = jax.random.split(key, 4)
    lim1 = 1.0 / jnp.sqrt(jnp.float32(input_dim))
    lim2 = 1.0 / jnp.sqrt(jnp.float32(hidden))
    w1 = jax.random.uniform(k1, (input_dim, hidden), jnp.float32, -lim1, lim1)
    b1 = jax.random.uniform(k2, (hidden,), jnp.float32, -lim1, lim1)
    w2 = jax.random.uniform(k3, (hidden, 1), jnp.float32, -lim2, lim2)
    b2 = jax.random.uniform(k4, (1,), jnp.float32, -lim2, lim2)
    return w1, b1, w2, b2


if __name__ == "__main__":
    key = jax.random.PRNGKey(0)
    kx, kp = jax.random.split(key)

    # Small ragged batch: exercises the zero-padding path (Bp=128, 1 tile).
    B, D = 20, 32
    x = jax.random.normal(kx, (B, D), jnp.float32)
    w1, b1, w2, b2 = init_params(kp, D)

    pred = jax.block_until_ready(neural_net_forward(x, w1, b1, w2, b2))
    ref = (jnp.maximum(x @ w1 + b1, 0.0) @ w2 + b2)[:, 0]
    assert pred.shape == (B,)
    assert jnp.allclose(pred, ref, atol=1e-5, rtol=1e-5)

    # Multi-step grid + ragged tail: force tb=128 to exercise the pipeline.
    B2 = 300
    x2 = jax.random.normal(kx, (B2, D), jnp.float32)
    pred2 = jax.block_until_ready(
        neural_net_forward(x2, w1, b1, w2, b2, tb=128))
    ref2 = (jnp.maximum(x2 @ w1 + b1, 0.0) @ w2 + b2)[:, 0]
    assert pred2.shape == (B2,)
    assert jnp.allclose(pred2, ref2, atol=1e-5, rtol=1e-5)

    # TODO(synk): cal_loss / nn.MSELoss is a training helper, not part of forward.
    print("KERNEL_OK")
</pallas_src>

<mosaic_0001>
module attributes {stable_mosaic.version = 11 : i64} {
  func.func @mlp_kernel(%arg0: i32, %arg1: memref<128x32xf32, #tpu.memory_space<vmem>>, %arg2: memref<32x64xf32, #tpu.memory_space<vmem>>, %arg3: memref<1x64xf32, #tpu.memory_space<vmem>>, %arg4: memref<1x64xf32, #tpu.memory_space<vmem>>, %arg5: memref<1xf32, #tpu.memory_space<smem>>, %arg6: memref<1x128xf32, #tpu.memory_space<vmem>>) attributes {dimension_semantics = [#tpu.dimension_semantics<parallel>], iteration_bounds = array<i64: 1>, scalar_prefetch = 0 : i64, scratch_operands = 0 : i64, tpu.core_type = #tpu.core_type<tc>, window_params = [{transform_indices = @transform_0, window_bounds = array<i64: 128, 32>}, {pipeline_mode = #tpu.pipeline_mode<synchronous>, transform_indices = @transform_1, window_bounds = array<i64: 32, 64>}, {pipeline_mode = #tpu.pipeline_mode<synchronous>, transform_indices = @transform_2, window_bounds = array<i64: 1, 64>}, {pipeline_mode = #tpu.pipeline_mode<synchronous>, transform_indices = @transform_3, window_bounds = array<i64: 1, 64>}, {transform_indices = @transform_4, window_bounds = array<i64: 1>}, {transform_indices = @transform_5, window_bounds = array<i64: 1, 128>}]} {
    %c0 = arith.constant 0 : index
    %c0_0 = arith.constant 0 : index
    %0 = vector.load %arg1[%c0, %c0_0] : memref<128x32xf32, #tpu.memory_space<vmem>>, vector<128x32xf32>
    %c0_1 = arith.constant 0 : index
    %c0_2 = arith.constant 0 : index
    %1 = vector.load %arg2[%c0_1, %c0_2] : memref<32x64xf32, #tpu.memory_space<vmem>>, vector<32x64xf32>
    %cst = arith.constant dense<0.000000e+00> : vector<128x64xf32>
    %2 = tpu.matmul %0, %1, %cst {dimension_numbers = #tpu.dot_dimension_numbers<[1], [0], [0], [1], [0, 0, 1, 1], [], []>} : vector<128x32xf32>, vector<32x64xf32>, vector<128x64xf32> -> vector<128x64xf32>
    %c0_3 = arith.constant 0 : index
    %c0_4 = arith.constant 0 : index
    %3 = vector.load %arg3[%c0_3, %c0_4] : memref<1x64xf32, #tpu.memory_space<vmem>>, vector<1x64xf32>
    %4 = vector.broadcast %3 : vector<1x64xf32> to vector<128x64xf32>
    %5 = arith.addf %2, %4 : vector<128x64xf32>
    %cst_5 = arith.constant 0.000000e+00 : f32
    %6 = vector.broadcast %cst_5 : f32 to vector<128x64xf32>
    %7 = arith.maximumf %5, %6 : vector<128x64xf32>
    %c0_6 = arith.constant 0 : index
    %c0_7 = arith.constant 0 : index
    %8 = vector.load %arg4[%c0_6, %c0_7] : memref<1x64xf32, #tpu.memory_space<vmem>>, vector<1x64xf32>
    %cst_8 = arith.constant dense<0.000000e+00> : vector<1x128xf32>
    %9 = tpu.matmul %8, %7, %cst_8 {dimension_numbers = #tpu.dot_dimension_numbers<[1], [1], [0], [0], [0, 0, 1, 0], [], []>} : vector<1x64xf32>, vector<128x64xf32>, vector<1x128xf32> -> vector<1x128xf32>
    %c0_9 = arith.constant 0 : index
    %10 = memref.load %arg5[%c0_9] : memref<1xf32, #tpu.memory_space<smem>>
    %11 = vector.broadcast %10 : f32 to vector<1x128xf32>
    %12 = arith.addf %9, %11 : vector<1x128xf32>
    %c0_10 = arith.constant 0 : index
    %c0_11 = arith.constant 0 : index
    %13 = vector.load %arg6[%c0_10, %c0_11] : memref<1x128xf32, #tpu.memory_space<vmem>>, vector<1x128xf32>
    tpu.vector_store %arg6[%c0_10, %c0_11], %12 {strides = array<i32>} : memref<1x128xf32, #tpu.memory_space<vmem>>, vector<1x128xf32>,
    return
  }
  func.func @transform_0(%arg0: i32) -> (i32, i32) {
    %c0_i32 = arith.constant 0 : i32
    %c0_i32_0 = arith.constant 0 : i32
    return %arg0, %c0_i32 : i32, i32
  }
  func.func @transform_1(%arg0: i32) -> (i32, i32) {
    %c0_i32 = arith.constant 0 : i32
    %c0_i32_0 = arith.constant 0 : i32
    %c0_i32_1 = arith.constant 0 : i32
    return %c0_i32, %c0_i32_0 : i32, i32
  }
  func.func @transform_2(%arg0: i32) -> (i32, i32) {
    %c0_i32 = arith.constant 0 : i32
    %c0_i32_0 = arith.constant 0 : i32
    %c0_i32_1 = arith.constant 0 : i32
    return %c0_i32, %c0_i32_0 : i32, i32
  }
  func.func @transform_3(%arg0: i32) -> (i32, i32) {
    %c0_i32 = arith.constant 0 : i32
    %c0_i32_0 = arith.constant 0 : i32
    %c0_i32_1 = arith.constant 0 : i32
    return %c0_i32, %c0_i32_0 : i32, i32
  }
  func.func @transform_4(%arg0: i32) -> i32 {
    %c0_i32 = arith.constant 0 : i32
    %c0_i32_0 = arith.constant 0 : i32
    return %c0_i32 : i32
  }
  func.func @transform_5(%arg0: i32) -> (i32, i32) {
    %c0_i32 = arith.constant 0 : i32
    %c0_i32_0 = arith.constant 0 : i32
    return %c0_i32, %arg0 : i32, i32
  }
}

</mosaic_0001>

<llo_original>
// kernel: tpu_custom_call.1
$region0: #{tpu_custom_call.1}
  #allocation0 [shape = 'u32[]', space=smem, size = 0x4, offset = 0x4, fixed_abs, tag = 'smem constant byte address 0x4 - core index']
  #allocation1 [shape = 'u32[144,128]{1,0:T(1,128)}', space=vmem, size = 0x12000, scoped, tag = 'internal scratch']
  #allocation2 [shape = 'f32[1]{0:T(128)S(6)}', space=smem, size = 0x200, scoped, tag = 'scoped memory for tpu_custom_call.1']
  %s0 = inlined_call_operand.vmem [shape: f32[128,32], index: 0, kind: input, shape index: {}]
  %s1 = inlined_call_operand.vmem [shape: f32[32,64], index: 1, kind: input, shape index: {}]
  %s2 = inlined_call_operand.vmem [shape: f32[1,64], index: 2, kind: input, shape index: {}]
  %s3 = inlined_call_operand.vmem [shape: f32[1,64], index: 3, kind: input, shape index: {}]
  %s4 = inlined_call_operand.<no memory space> [shape: f32[1], index: 4, kind: input, shape index: {}]
  %s5 = inlined_call_operand.hbm [shape: f32[1,128], index: 5, kind: output, shape index: {}]
  %s6 = sld [smem:[#allocation0]]
  $region30: #{tpu_custom_call.1} parent=0
    _
  %s8 = ssub.s32 1, %s6
  %s9 = scalar_select 0, %s8, %s6
  %10 = sst [smem:[#allocation2]] %s4
  $region1: #{tpu_custom_call.1} parent=0
    #allocation3 [shape = 'u8[512]{0}', space=vmem, size = 0x400, scoped, tag = 'output window, operand 0, single buffered']
    #allocation4 [shape = 's32[1]{0}', space=sflag, size = 0x4, scoped, tag = 'scoped memory for tpu_custom_call.1']
    %11 = vsyncpa [#allocation4], 0
    // Predicated region
    $region2: #{tpu_custom_call.1} parent=1 // pred_check
      _
    $region3: #{tpu_custom_call.1} parent=1 // pred_check_branch
      %13 = sbr.rel (0) target = $region5
    $region4: #{tpu_custom_call.1} parent=1 // pred_region
      _
    $region5: #{tpu_custom_call.1} parent=1 // pred_fallthru
      _
    // Predicated region
    $region6: #{tpu_custom_call.1} parent=1 // pred_check
      _
    $region7: #{tpu_custom_call.1} parent=1 // pred_check_branch
      %15 = sbr.rel (0) target = $region9
    $region8: #{tpu_custom_call.1} parent=1 // pred_region
      _
    $region9: #{tpu_custom_call.1} parent=1 // pred_fallthru
      _
    // Predicated region
    $region10: #{tpu_custom_call.1} parent=1 // pred_check
      _
    $region11: #{tpu_custom_call.1} parent=1 // pred_check_branch
      %17 = sbr.rel (0) target = $region13
    $region12: #{tpu_custom_call.1} parent=1 // pred_region
      _
    $region13: #{tpu_custom_call.1} parent=1 // pred_fallthru
      _
    // Predicated region
    $region14: #{tpu_custom_call.1} parent=1 // pred_check
      _
    $region15: #{tpu_custom_call.1} parent=1 // pred_check_branch
      %19 = sbr.rel (0) target = $region17
    $region16: #{tpu_custom_call.1} parent=1 // pred_region
      _
    $region17: #{tpu_custom_call.1} parent=1 // pred_fallthru
      _
    // Predicated region
    $region18: #{tpu_custom_call.1} parent=1 // pred_check
      _
    $region19: #{tpu_custom_call.1} parent=1 // pred_check_branch
      %21 = sbr.rel (0) target = $region21
    $region20: #{tpu_custom_call.1} parent=1 // pred_region
      _
    $region21: #{tpu_custom_call.1} parent=1 // pred_fallthru
      _
    %v22 = vld [vmem:[%s0] sm:$0xff]
    %v23 = vld [vmem:[%s0 + $0x8] sm:$0xff]
    %v24 = vld [vmem:[%s0 + $0x10] sm:$0xff]
    %v25 = vld [vmem:[%s0 + $0x18] sm:$0xff]
    %v26 = vld [vmem:[%s0 + $0x20] sm:$0xff]
    %v27 = vld [vmem:[%s0 + $0x28] sm:$0xff]
    %v28 = vld [vmem:[%s0 + $0x30] sm:$0xff]
    %v29 = vld [vmem:[%s0 + $0x38] sm:$0xff]
    %v30 = vld [vmem:[%s0 + $0x40] sm:$0xff]
    %v31 = vld [vmem:[%s0 + $0x48] sm:$0xff]
    %v32 = vld [vmem:[%s0 + $0x50] sm:$0xff]
    %v33 = vld [vmem:[%s0 + $0x58] sm:$0xff]
    %v34 = vld [vmem:[%s0 + $0x60] sm:$0xff]
    %v35 = vld [vmem:[%s0 + $0x68] sm:$0xff]
    %v36 = vld [vmem:[%s0 + $0x70] sm:$0xff]
    %v37 = vld [vmem:[%s0 + $0x78] sm:$0xff]
    %v38 = vld [vmem:[%s1] sm:$0xff]
    %v39 = vld [vmem:[%s1 + $0x8] sm:$0xff]
    %v40 = vld [vmem:[%s1 + $0x10] sm:$0xff]
    %v41 = vld [vmem:[%s1 + $0x18] sm:$0xff]
    %v42 = vld [vmem:[%s2] sm:$0x1]
    %v44 = vlaneseq
    %v45 = vshrl.u32 %v44, 7
    %v46 = vsub.s32 0, %v45
    %v47 = vrot.slane %v42, %v46
    %vm49 = vcmask 261120
    %v51 = vsel %vm49, %v22, 0
    %v54 = vsel %vm49, %v23, 0
    %v57 = vsel %vm49, %v24, 0
    %v60 = vsel %vm49, %v25, 0
    %v63 = vsel %vm49, %v26, 0
    %v66 = vsel %vm49, %v27, 0
    %v69 = vsel %vm49, %v28, 0
    %v72 = vsel %vm49, %v29, 0
    %v75 = vsel %vm49, %v30, 0
    %v78 = vsel %vm49, %v31, 0
    %v81 = vsel %vm49, %v32, 0
    %v84 = vsel %vm49, %v33, 0
    %v87 = vsel %vm49, %v34, 0
    %v90 = vsel %vm49, %v35, 0
    %v93 = vsel %vm49, %v36, 0
    %v96 = vsel %vm49, %v37, 0
    %98 = vmatprep.subr.mxu0 0.0
    %99 = vmatpush1.msra.mxu0 %v38
    %100 = vmatprep.subr.mxu0 0.0
    %101 = vmatpush1.msra.mxu0 %v39
    %102 = vmatprep.subr.mxu0 0.0
    %103 = vmatpush1.msra.mxu0 %v40
    %104 = vmatprep.subr.mxu0 0.0
    %105 = vmatpush1.msra.mxu0 %v41
    %106 = vmatprep.subr.mxu0 0.0
    %107 = vmatpush1.msra.mxu0 0.0
    %108 = vmatprep.subr.mxu0 0.0
    %109 = vmatpush1.msra.mxu0 0.0
    %110 = vmatprep.subr.mxu0 0.0
    %111 = vmatpush1.msra.mxu0 0.0
    %112 = vmatprep.subr.mxu0 0.0
    %113 = vmatpush1.msra.mxu0 0.0
    %114 = vmatprep.subr.mxu0 0.0
    %115 = vmatpush1.msra.mxu0 0.0
    %116 = vmatprep.subr.mxu0 0.0
    %117 = vmatpush1.msra.mxu0 0.0
    %118 = vmatprep.subr.mxu0 0.0
    %119 = vmatpush1.msra.mxu0 0.0
    %120 = vmatprep.subr.mxu0 0.0
    %121 = vmatpush1.msra.mxu0 0.0
    %122 = vmatprep.subr.mxu0 0.0
    %123 = vmatpush1.msra.mxu0 0.0
    %124 = vmatprep.subr.mxu0 0.0
    %125 = vmatpush1.msra.mxu0 0.0
    %126 = vmatprep.subr.mxu0 0.0
    %127 = vmatpush1.msra.mxu0 0.0
    %128 = vmatprep.subr.mxu0 0.0
    %129 = vmatpush1.msra.mxu0 0.0
    %130 = vmatprep.subr.mxu0 0.0
    %131 = vmatpush1.msra.mxu0 0.0
    %132 = vmatprep.subr.mxu0 0.0
    %133 = vmatpush1.msra.mxu0 0.0
    %134 = vmatprep.subr.mxu0 0.0
    %135 = vmatpush1.msra.mxu0 0.0
    %136 = vmatprep.subr.mxu0 0.0
    %137 = vmatpush1.msra.mxu0 0.0
    %138 = vmatprep.subr.mxu0 0.0
    %139 = vmatpush1.msra.mxu0 0.0
    %140 = vmatprep.subr.mxu0 0.0
    %141 = vmatpush1.msra.mxu0 0.0
    %142 = vmatprep.subr.mxu0 0.0
    %143 = vmatpush1.msra.mxu0 0.0
    %144 = vmatprep.subr.mxu0 0.0
    %145 = vmatpush1.msra.mxu0 0.0
    %146 = vmatprep.subr.mxu0 0.0
    %147 = vmatpush1.msra.mxu0 0.0
    %148 = vmatprep.subr.mxu0 0.0
    %149 = vmatpush1.msra.mxu0 0.0
    %150 = vmatprep.subr.mxu0 0.0
    %151 = vmatpush1.msra.mxu0 0.0
    %152 = vmatprep.subr.mxu0 0.0
    %153 = vmatpush1.msra.mxu0 0.0
    %154 = vmatprep.subr.mxu0 0.0
    %155 = vmatpush1.msra.mxu0 0.0
    %156 = vmatprep.subr.mxu0 0.0
    %157 = vmatpush1.msra.mxu0 0.0
    %158 = vmatprep.subr.mxu0 0.0
    %159 = vmatpush1.msra.mxu0 0.0
    %160 = vmatprep.subr.mxu0 0.0
    %161 = vmatpush1.msra.mxu0 0.0
    %162 = vmatprep.mubr.f32.mxu0 0.0
    %163 = vmatmul.mubr.f32.gmra.mrb[0].mxu0 %v51
    %v164 = vpop.f32.mrb[0].mxu0
    %v165 = vadd.f32 %v47, %v164
    %v166 = vpop.f32.mrb[0].mxu0
    %167 = vmatprep.mubr.f32.mxu0 0.0
    %168 = vmatmul.mubr.f32.gmra.mrb[0].mxu0 %v54
    %v169 = vpop.f32.mrb[0].mxu0
    %v170 = vadd.f32 %v47, %v169
    %v171 = vpop.f32.mrb[0].mxu0
    %172 = vmatprep.mubr.f32.mxu0 0.0
    %173 = vmatmul.mubr.f32.gmra.mrb[0].mxu0 %v57
    %v174 = vpop.f32.mrb[0].mxu0
    %v175 = vadd.f32 %v47, %v174
    %v176 = vpop.f32.mrb[0].mxu0
    %177 = vmatprep.mubr.f32.mxu0 0.0
    %178 = vmatmul.mubr.f32.gmra.mrb[0].mxu0 %v60
    %v179 = vpop.f32.mrb[0].mxu0
    %v180 = vadd.f32 %v47, %v179
    %v181 = vpop.f32.mrb[0].mxu0
    %182 = vmatprep.mubr.f32.mxu0 0.0
    %183 = vmatmul.mubr.f32.gmra.mrb[0].mxu0 %v63
    %v184 = vpop.f32.mrb[0].mxu0
    %v185 = vadd.f32 %v47, %v184
    %v186 = vpop.f32.mrb[0].mxu0
    %187 = vmatprep.mubr.f32.mxu0 0.0
    %188 = vmatmul.mubr.f32.gmra.mrb[0].mxu0 %v66
    %v189 = vpop.f32.mrb[0].mxu0
    %v190 = vadd.f32 %v47, %v189
    %v191 = vpop.f32.mrb[0].mxu0
    %192 = vmatprep.mubr.f32.mxu0 0.0
    %193 = vmatmul.mubr.f32.gmra.mrb[0].mxu0 %v69
    %v194 = vpop.f32.mrb[0].mxu0
    %v195 = vadd.f32 %v47, %v194
    %v196 = vpop.f32.mrb[0].mxu0
    %197 = vmatprep.mubr.f32.mxu0 0.0
    %198 = vmatmul.mubr.f32.gmra.mrb[0].mxu0 %v72
    %v199 = vpop.f32.mrb[0].mxu0
    %v200 = vadd.f32 %v47, %v199
    %v201 = vpop.f32.mrb[0].mxu0
    %202 = vmatprep.mubr.f32.mxu0 0.0
    %203 = vmatmul.mubr.f32.gmra.mrb[0].mxu0 %v75
    %v204 = vpop.f32.mrb[0].mxu0
    %v205 = vadd.f32 %v47, %v204
    %v206 = vpop.f32.mrb[0].mxu0
    %207 = vmatprep.mubr.f32.mxu0 0.0
    %208 = vmatmul.mubr.f32.gmra.mrb[0].mxu0 %v78
    %v209 = vpop.f32.mrb[0].mxu0
    %v210 = vadd.f32 %v47, %v209
    %v211 = vpop.f32.mrb[0].mxu0
    %212 = vmatprep.mubr.f32.mxu0 0.0
    %213 = vmatmul.mubr.f32.gmra.mrb[0].mxu0 %v81
    %v214 = vpop.f32.mrb[0].mxu0
    %v215 = vadd.f32 %v47, %v214
    %v216 = vpop.f32.mrb[0].mxu0
    %217 = vmatprep.mubr.f32.mxu0 0.0
    %218 = vmatmul.mubr.f32.gmra.mrb[0].mxu0 %v84
    %v219 = vpop.f32.mrb[0].mxu0
    %v220 = vadd.f32 %v47, %v219
    %v221 = vpop.f32.mrb[0].mxu0
    %222 = vmatprep.mubr.f32.mxu0 0.0
    %223 = vmatmul.mubr.f32.gmra.mrb[0].mxu0 %v87
    %v224 = vpop.f32.mrb[0].mxu0
    %v225 = vadd.f32 %v47, %v224
    %v226 = vpop.f32.mrb[0].mxu0
    %227 = vmatprep.mubr.f32.mxu0 0.0
    %228 = vmatmul.mubr.f32.gmra.mrb[0].mxu0 %v90
    %v229 = vpop.f32.mrb[0].mxu0
    %v230 = vadd.f32 %v47, %v229
    %v231 = vpop.f32.mrb[0].mxu0
    %232 = vmatprep.mubr.f32.mxu0 0.0
    %233 = vmatmul.mubr.f32.gmra.mrb[0].mxu0 %v93
    %v234 = vpop.f32.mrb[0].mxu0
    %v235 = vadd.f32 %v47, %v234
    %v236 = vpop.f32.mrb[0].mxu0
    %237 = vmatprep.mubr.f32.mxu0 0.0
    %238 = vmatmul.mubr.f32.gmra.mrb[0].mxu0 %v96
    %v239 = vpop.f32.mrb[0].mxu0
    %v240 = vadd.f32 %v47, %v239
    %v241 = vpop.f32.mrb[0].mxu0
    %242 = vdwg.mxu0
    %v243 = vmax.f32 %v165, 0.0
    %v244 = vmax.f32 %v170, 0.0
    %v245 = vmax.f32 %v175, 0.0
    %v246 = vmax.f32 %v180, 0.0
    %v247 = vmax.f32 %v185, 0.0
    %v248 = vmax.f32 %v190, 0.0
    %v249 = vmax.f32 %v195, 0.0
    %v250 = vmax.f32 %v200, 0.0
    %v251 = vmax.f32 %v205, 0.0
    %v252 = vmax.f32 %v210, 0.0
    %v253 = vmax.f32 %v215, 0.0
    %v254 = vmax.f32 %v220, 0.0
    %v255 = vmax.f32 %v225, 0.0
    %v256 = vmax.f32 %v230, 0.0
    %v257 = vmax.f32 %v235, 0.0
    %v258 = vmax.f32 %v240, 0.0
    %v259 = vld [vmem:[%s3] sm:$0x1]
    %s260 = sld [smem:[#allocation2]]
    %v261 = vstv %s260
    %vm262 = vcmask 523264
    %v264 = vsel %vm262, %v259, 0
    %v267 = vsel %vm262, %v243, 0
    %v270 = vsel %vm262, %v244, 0
    %v273 = vsel %vm262, %v245, 0
    %v276 = vsel %vm262, %v246, 0
    %v279 = vsel %vm262, %v247, 0
    %v282 = vsel %vm262, %v248, 0
    %v285 = vsel %vm262, %v249, 0
    %v288 = vsel %vm262, %v250, 0
    %v291 = vsel %vm262, %v251, 0
    %v294 = vsel %vm262, %v252, 0
    %v297 = vsel %vm262, %v253, 0
    %v300 = vsel %vm262, %v254, 0
    %v303 = vsel %vm262, %v255, 0
    %v306 = vsel %vm262, %v256, 0
    %v309 = vsel %vm262, %v257, 0
    %v312 = vsel %vm262, %v258, 0
    %314 = vmatprep.subr.mxu0 0.0
    %315 = vmatpush1.xpose.msra.mxu0 %v267
    %316 = vmatprep.subr.mxu0 0.0
    %317 = vmatpush1.xpose.msra.mxu0 %v270
    %318 = vmatprep.subr.mxu0 0.0
    %319 = vmatpush1.xpose.msra.mxu0 %v273
    %320 = vmatprep.subr.mxu0 0.0
    %321 = vmatpush1.xpose.msra.mxu0 %v276
    %322 = vmatprep.subr.mxu0 0.0
    %323 = vmatpush1.xpose.msra.mxu0 %v279
    %324 = vmatprep.subr.mxu0 0.0
    %325 = vmatpush1.xpose.msra.mxu0 %v282
    %326 = vmatprep.subr.mxu0 0.0
    %327 = vmatpush1.xpose.msra.mxu0 %v285
    %328 = vmatprep.subr.mxu0 0.0
    %329 = vmatpush1.xpose.msra.mxu0 %v288
    %330 = vmatprep.subr.mxu0 0.0
    %331 = vmatpush1.xpose.msra.mxu0 %v291
    %332 = vmatprep.subr.mxu0 0.0
    %333 = vmatpush1.xpose.msra.mxu0 %v294
    %334 = vmatprep.subr.mxu0 0.0
    %335 = vmatpush1.xpose.msra.mxu0 %v297
    %336 = vmatprep.subr.mxu0 0.0
    %337 = vmatpush1.xpose.msra.mxu0 %v300
    %338 = vmatprep.subr.mxu0 0.0
    %339 = vmatpush1.xpose.msra.mxu0 %v303
    %340 = vmatprep.subr.mxu0 0.0
    %341 = vmatpush1.xpose.msra.mxu0 %v306
    %342 = vmatprep.subr.mxu0 0.0
    %343 = vmatpush1.xpose.msra.mxu0 %v309
    %344 = vmatprep.subr.mxu0 0.0
    %345 = vmatpush1.xpose.msra.mxu0 %v312
    %346 = vmatprep.subr.mxu0 0.0
    %347 = vmatpush1.xpose.msra.mxu0 0.0
    %348 = vmatprep.subr.mxu0 0.0
    %349 = vmatpush1.xpose.msra.mxu0 0.0
    %350 = vmatprep.subr.mxu0 0.0
    %351 = vmatpush1.xpose.msra.mxu0 0.0
    %352 = vmatprep.subr.mxu0 0.0
    %353 = vmatpush1.xpose.msra.mxu0 0.0
    %354 = vmatprep.subr.mxu0 0.0
    %355 = vmatpush1.xpose.msra.mxu0 0.0
    %356 = vmatprep.subr.mxu0 0.0
    %357 = vmatpush1.xpose.msra.mxu0 0.0
    %358 = vmatprep.subr.mxu0 0.0
    %359 = vmatpush1.xpose.msra.mxu0 0.0
    %360 = vmatprep.subr.mxu0 0.0
    %361 = vmatpush1.xpose.msra.mxu0 0.0
    %362 = vmatprep.subr.mxu0 0.0
    %363 = vmatpush1.xpose.msra.mxu0 0.0
    %364 = vmatprep.subr.mxu0 0.0
    %365 = vmatpush1.xpose.msra.mxu0 0.0
    %366 = vmatprep.subr.mxu0 0.0
    %367 = vmatpush1.xpose.msra.mxu0 0.0
    %368 = vmatprep.subr.mxu0 0.0
    %369 = vmatpush1.xpose.msra.mxu0 0.0
    %370 = vmatprep.subr.mxu0 0.0
    %371 = vmatpush1.xpose.msra.mxu0 0.0
    %372 = vmatprep.subr.mxu0 0.0
    %373 = vmatpush1.xpose.msra.mxu0 0.0
    %374 = vmatprep.subr.mxu0 0.0
    %375 = vmatpush1.xpose.msra.mxu0 0.0
    %376 = vmatprep.subr.mxu0 0.0
    %377 = vmatpush1.xpose.msra.mxu0 0.0
    %378 = vmatprep.mubr.f32.mxu0 0.0
    %379 = vmatmul.mubr.f32.gmra.mrb[0].mxu0 %v264
    %v380 = vpop.f32.mrb[0].mxu0
    %v381 = vadd.f32 %v261, %v380
    %v382 = vpop.f32.mrb[0].mxu0
    %383 = vdwg.mxu0
    %384 = vst [vmem:[#allocation3] sm:$0x1] %v381
    // Predicated region
    $region22: #{tpu_custom_call.1} parent=1 // pred_check
      _
    $region23: #{tpu_custom_call.1} parent=1 // pred_check_branch
      %386 = sbr.rel (0) target = $region25
    $region24: #{tpu_custom_call.1} parent=1 // pred_region
      %s388 = ssub.s32 16, 16
      %389 = vsyncadd [#allocation4], %s388
      %s391 = sshll.u32 [#allocation3], 4
      %s392 = int_to_ptr.vmem [resolvable:$true] %s391
      %394 = dma.vmem_to_hbm [thread:$0]  %s392, 16, %s5, [#allocation4]
    $region25: #{tpu_custom_call.1} parent=1 // pred_fallthru
      _
    // Predicated region
    $region26: #{tpu_custom_call.1} parent=1 // pred_check
      _
    $region27: #{tpu_custom_call.1} parent=1 // pred_check_branch
      %396 = sbr.rel (0) target = $region29
    $region28: #{tpu_custom_call.1} parent=1 // pred_region
      %397 = dma.done [#allocation4], 16
    $region29: #{tpu_custom_call.1} parent=1 // pred_fallthru
      _
    %398 = vsyncpa [#allocation4], 1

</llo_original>
